<compile_context>
chip_gen: v6e
topology: v6e:2x2x1
jax: 0.10.0
libtpu: 0.0.40
codegen_flags: <defaults>
</compile_context>

<pallas_src>
import jax
import jax.numpy as jnp
import numpy as np
from jax.experimental import pallas as pl
from jax.experimental.pallas import tpu as pltpu

_EPS = 1e-5  # nn.GroupNorm default eps


def _round_up(x, m):
    return ((x + m - 1) // m) * m


def _subband_layout(subbands, input_channels, n_freq_bins):
    """Static geometry of the bin-major packed channel axis (pure Python)."""
    two_m = 2 * input_channels
    active = [(i, s, e) for i, (s, e) in enumerate(subbands) if s < n_freq_bins]
    f_need = max(e for _, _, e in active)
    raw_start = [s * two_m for _, s, _ in active]
    c_in = [(e - s) * two_m for _, s, e in active]
    off = [(rs // 8) * 8 for rs in raw_start]            # 8-sublane aligned window start
    head = [rs - o for rs, o in zip(raw_start, off)]
    c_max = _round_up(max(h + c for h, c in zip(head, c_in)), 8)
    c_glob = f_need * two_m
    c_pad = max(c_glob, max(o + c_max for o in off))     # so no window DMA runs OOB
    return active, f_need, c_in, off, head, c_max, c_glob, c_pad


def _fold_params(params, active, head, c_max, cout, input_channels, stream_dtype):
    """Fold GroupNorm gamma/beta into the 1x1 conv; permute columns to bin-major."""
    ws, auxs = [], []
    for (i, start, end), h in zip(active, head):
        gamma, beta, w, b = params[i]              # (C,), (C,), (Cout, C), (Cout,)
        n_bins = end - start
        c = w.shape[1]
        wf = w.astype(jnp.float32)
        wg = wf * gamma.astype(jnp.float32)[None, :]            # W' = W * diag(gamma)
        bprime = wf @ beta.astype(jnp.float32) + b.astype(jnp.float32)   # W@beta + b
        wsum = jnp.sum(wg, axis=1)                               # rowsum(W')
        # columns are (re/im, mic, bin)-ordered; permute to the slab's bin-major order
        wp = wg.reshape(cout, 2, input_channels, n_bins)
        wp = jnp.transpose(wp, (0, 3, 1, 2)).reshape(cout, c)
        blk = jnp.zeros((cout, c_max), jnp.float32).at[:, h:h + c].set(wp)
        ws.append(blk.astype(stream_dtype))
        auxs.append(jnp.stack([wsum, bprime], axis=1).astype(jnp.float32))  # (Cout, 2)
    return jnp.stack(ws), jnp.stack(auxs)


def _make_kernel(b_size, c_max, t_pad, t_true, eps):
    def kernel(off_ref, head_ref, cin_ref, x_hbm, w_ref, aux_ref, o_ref, xbuf, sem):
        s = pl.program_id(0)
        n_sub = pl.num_programs(0)

        def window_copy(step, slot):
            # (B, c_max, t_pad) channel window of the bin-major slab, HBM -> VMEM.
            return pltpu.make_async_copy(
                x_hbm.at[:, pl.ds(off_ref[step], c_max), :],
                xbuf.at[slot], sem.at[slot])

        @pl.when(s == 0)
        def _():
            window_copy(0, 0).start()            # prime slot 0

        @pl.when(s + 1 < n_sub)
        def _():
            window_copy(s + 1, (s + 1) % 2).start()   # prefetch next subband's window

        slot = s % 2
        window_copy(s, slot).wait()

        head = head_ref[s]
        c_in = cin_ref[s]
        inv_n = 1.0 / (c_in.astype(jnp.float32) * float(t_true))

        w = w_ref[0]                              # (Cout, c_max) folded, permuted weight
        aux = aux_ref[0]                          # (Cout, 2) f32
        wsum = aux[:, 0:1]                        # rowsum(W')
        bias = aux[:, 1:2]                        # W@beta + b

        # Mask: only rows [head, head+c_in) belong to this subband (neighbouring
        # subband rows are neutralised here for stats; zero W' columns for the matmul).
        row = jax.lax.broadcasted_iota(jnp.int32, (c_max, t_pad), 0)
        valid = jnp.logical_and(row >= head, row < head + c_in)

        for b in range(b_size):                   # B is small and static: unroll
            x = xbuf[slot, b]                     # (c_max, t_pad)
            xf = x.astype(jnp.float32)
            xm = jnp.where(valid, xf, 0.0)
            ssum = jnp.sum(xm)
            ssq = jnp.sum(xm * xm)
            mean = ssum * inv_n
            var = jnp.maximum(ssq * inv_n - mean * mean, 0.0)   # clamp: one-pass var
            scale = jax.lax.rsqrt(var + eps)
            # y = scale*(W'x) + (b' - scale*mean*rowsum(W'))  -- norm factored through
            shift = bias - (scale * mean) * wsum                # (Cout, 1)
            acc = jnp.dot(w, x, preferred_element_type=jnp.float32)   # (Cout, t_pad)
            o_ref[b] = (acc * scale + shift).astype(o_ref.dtype)

    return kernel


def band_split_forward(x, subbands, params, stream_dtype=None):
    """x: (B, M, F, T, 2). Returns (B, channels, n_active_subbands, T)."""
    B, M, Fbins, T, two = x.shape
    assert two == 2
    stream_dtype = jnp.dtype(stream_dtype or x.dtype)
    out_dtype = x.dtype

    (active, f_need, c_in, off, head, c_max, c_glob, c_pad) = _subband_layout(
        subbands, M, Fbins)
    n_sub = len(active)
    t_pad = _round_up(T, 128)

    # --- ONE bin-major layout transform of the input (no per-subband pad copy) ---
    xs = x[:, :, :f_need] if f_need <= Fbins else jnp.pad(
        x, ((0, 0), (0, 0), (0, f_need - Fbins), (0, 0), (0, 0)))
    if t_pad != T:
        xs = jnp.pad(xs, ((0, 0), (0, 0), (0, 0), (0, t_pad - T), (0, 0)))
    # (B, M, F, T, 2) -> (B, F, 2, M, T) -> (B, F*2*M, T): channel = f*2M + ri*M + m
    xs = jnp.transpose(xs, (0, 2, 4, 1, 3)).reshape(B, c_glob, t_pad)
    if c_pad > c_glob:
        xs = jnp.pad(xs, ((0, 0), (0, c_pad - c_glob), (0, 0)))
    xs = xs.astype(stream_dtype)

    cout = params[active[0][0]][2].shape[0]
    w_p, aux_p = _fold_params(params, active, head, c_max, cout, M, stream_dtype)

    off_arr = jnp.asarray(off, jnp.int32)
    head_arr = jnp.asarray(head, jnp.int32)
    cin_arr = jnp.asarray(c_in, jnp.int32)

    kernel = _make_kernel(B, c_max, t_pad, T, _EPS)

    item_s = jnp.dtype(stream_dtype).itemsize
    item_o = jnp.dtype(out_dtype).itemsize
    vmem_need = (2 * B * c_max * t_pad * item_s      # manual double buffer for x window
                 + 2 * cout * c_max * item_s         # pipelined weight blocks
                 + 2 * cout * 2 * 4                  # aux blocks
                 + 2 * B * cout * t_pad * item_o     # pipelined output blocks
                 + (1 << 20))
    cp_kwargs = dict(dimension_semantics=("arbitrary",))
    if vmem_need > 12 * 1024 * 1024:
        try:
            cap = int(pltpu.get_tpu_info().vmem_capacity_bytes)
        except Exception:
            cap = 64 * 1024 * 1024                   # v7x-safe fallback
        cp_kwargs["vmem_limit_bytes"] = int(min(vmem_need, (cap * 3) // 4))

    cost = pl.CostEstimate(
        flops=2 * n_sub * B * cout * c_max * t_pad + 3 * n_sub * B * c_max * t_pad,
        transcendentals=n_sub * B,
        bytes_accessed=(xs.size + w_p.size) * item_s + B * cout * n_sub * t_pad * item_o,
    )

    out = pl.pallas_call(
        kernel,
        out_shape=jax.ShapeDtypeStruct((B, cout, n_sub * t_pad), out_dtype),
        grid_spec=pltpu.PrefetchScalarGridSpec(
            num_scalar_prefetch=3,
            grid=(n_sub,),
            in_specs=[
                pl.BlockSpec(memory_space=pl.ANY),                        # x slab in HBM
                pl.BlockSpec((1, cout, c_max), lambda s, *_: (s, 0, 0)),  # W'
                pl.BlockSpec((1, cout, 2), lambda s, *_: (s, 0, 0)),      # [wsum, b']
            ],
            out_specs=pl.BlockSpec((B, cout, t_pad), lambda s, *_: (0, 0, s)),
            scratch_shapes=[
                pltpu.VMEM((2, B, c_max, t_pad), stream_dtype),   # double-buffered window
                pltpu.SemaphoreType.DMA((2,)),
            ],
        ),
        compiler_params=pltpu.CompilerParams(**cp_kwargs),
        cost_estimate=cost,
    )(off_arr, head_arr, cin_arr, xs, w_p, aux_p)

    out = out.reshape(B, cout, n_sub, t_pad)
    if t_pad != T:
        out = out[..., :T]
    return out


def init_params(key, subbands, input_channels, channels, dtype=jnp.float32):
    """Deterministic synthetic parameters (shapes match the PyTorch __init__)."""
    params = []
    for (start, end) in subbands:
        c_in = 2 * input_channels * (end - start)
        key, k1, k2, k3, k4 = jax.random.split(key, 5)
        gamma = (1.0 + 0.1 * jax.random.normal(k1, (c_in,))).astype(dtype)
        beta = (0.1 * jax.random.normal(k2, (c_in,))).astype(dtype)
        w = (jax.random.normal(k3, (channels, c_in)) / np.sqrt(c_in)).astype(dtype)
        b = (0.1 * jax.random.normal(k4, (channels,))).astype(dtype)
        params.append((gamma, beta, w, b))
    return params


def _reference_forward(x, subbands, params):
    """Pure-JAX mirror of the PyTorch forward (causal=False)."""
    B, M, Fbins, T, _ = x.shape
    outs = []
    for i, (start, end) in enumerate(subbands):
        xi = x[:, :, start:end, :, :]
        if xi.shape[2] == 0:
            continue
        n_bins = end - start
        if xi.shape[2] < n_bins:
            xi = jnp.pad(xi, ((0, 0), (0, 0), (0, n_bins - xi.shape[2]), (0, 0), (0, 0)))
        xi = jnp.moveaxis(xi, -1, 1).reshape(B, 2 * M * n_bins, T)
        gamma, beta, w, b = params[i]
        mean = jnp.mean(xi, axis=(1, 2), keepdims=True)
        var = jnp.mean(jnp.square(xi - mean), axis=(1, 2), keepdims=True)
        xn = (xi - mean) / jnp.sqrt(var + _EPS)
        xn = xn * gamma[None, :, None] + beta[None, :, None]
        y = jnp.einsum("oc,bct->bot", w, xn) + b[None, :, None]
        outs.append(y)
    return jnp.stack(outs, axis=2)


if __name__ == "__main__":
    key = jax.random.PRNGKey(0)
    kx, kp, kx2, kp2 = jax.random.split(key, 4)

    # --- Main check: f32 streams, lane-dense T ---
    B, M, Fbins, T = 2, 2, 16, 128
    channels = 32
    subbands = ((0, 4), (4, 8), (8, 16))          # per-subband C_in = 16, 16, 32
    x = jax.random.normal(kx, (B, M, Fbins, T, 2), dtype=jnp.float32)
    params = init_params(kp, subbands, M, channels)

    fwd = jax.jit(lambda xx, pp: band_split_forward(xx, subbands, pp))
    out = jax.block_until_ready(fwd(x, params))
    ref = _reference_forward(x, subbands, params)
    assert out.shape == (B, channels, len(subbands), T), out.shape
    np.testing.assert_allclose(np.asarray(out), np.asarray(ref), rtol=2e-3, atol=2e-3)

    # --- Secondary check: bf16 x/W' streams, T % 128 != 0 (pad + slice path),
    #     unaligned subband start (head > 0) ---
    B2, M2, F2, T2, ch2 = 2, 1, 16, 96, 16
    sb2 = ((0, 3), (3, 8), (8, 16))               # per-subband C_in = 6, 10, 16
    x2 = jax.random.normal(kx2, (B2, M2, F2, T2, 2), dtype=jnp.float32)
    p2 = init_params(kp2, sb2, M2, ch2)
    fwd2 = jax.jit(lambda xx, pp: band_split_forward(xx, sb2, pp,
                                                     stream_dtype=jnp.bfloat16))
    out2 = jax.block_until_ready(fwd2(x2, p2))
    ref2 = _reference_forward(x2, sb2, p2)
    assert out2.shape == (B2, ch2, len(sb2), T2), out2.shape
    np.testing.assert_allclose(np.asarray(out2), np.asarray(ref2), rtol=5e-2, atol=5e-2)

    print("KERNEL_OK")
</pallas_src>

<mosaic_0001>
module attributes {stable_mosaic.version = 11 : i64} {
  func.func @kernel(%arg0: i32, %arg1: memref<3xi32, #tpu.memory_space<smem>>, %arg2: memref<3xi32, #tpu.memory_space<smem>>, %arg3: memref<3xi32, #tpu.memory_space<smem>>, %arg4: memref<2x64x128xf32, #tpu.memory_space<any>>, %arg5: memref<1x32x32xf32, #tpu.memory_space<vmem>>, %arg6: memref<1x32x2xf32, #tpu.memory_space<vmem>>, %arg7: memref<2x32x128xf32, #tpu.memory_space<vmem>>, %arg8: memref<2x2x32x128xf32, #tpu.memory_space<vmem>>, %arg9: memref<2x!tpu.dma_semaphore, #tpu.memory_space<semaphore_mem>>) attributes {dimension_semantics = [#tpu.dimension_semantics<arbitrary>], iteration_bounds = array<i64: 3>, scalar_prefetch = 3 : i64, scratch_operands = 2 : i64, tpu.core_type = #tpu.core_type<tc>, window_params = [{}, {transform_indices = @transform_1, window_bounds = array<i64: 1, 32, 32>}, {transform_indices = @transform_2, window_bounds = array<i64: 1, 32, 2>}, {transform_indices = @transform_3, window_bounds = array<i64: 2, 32, 128>}]} {
    %c0_i32 = arith.constant 0 : i32
    %0 = arith.cmpi eq, %arg0, %c0_i32 : i32
    %1 = arith.extui %0 : i1 to i32
    %c0_i32_0 = arith.constant 0 : i32
    %2 = arith.cmpi ne, %1, %c0_i32_0 : i32
    scf.if %2 {
      %c0_41 = arith.constant 0 : index
      %110 = memref.load %arg1[%c0_41] : memref<3xi32, #tpu.memory_space<smem>>
      %c0_i32_42 = arith.constant 0 : i32
      %c0_i32_43 = arith.constant 0 : i32
      %c0_i32_44 = arith.constant 0 : i32
      %c0_i32_45 = arith.constant 0 : i32
      %111 = tpu.memref_slice %arg4[%c0_i32_44, %110, %c0_i32_45] : memref<2x64x128xf32, #tpu.memory_space<any>> -> memref<2x32x128xf32, #tpu.memory_space<any>>
      %c0_i32_46 = arith.constant 0 : i32
      %c0_i32_47 = arith.constant 0 : i32
      %c0_i32_48 = arith.constant 0 : i32
      %112 = tpu.memref_slice %arg8[%c0_i32_42, %c0_i32_46, %c0_i32_47, %c0_i32_48] : memref<2x2x32x128xf32, #tpu.memory_space<vmem>> -> memref<1x2x32x128xf32, #tpu.memory_space<vmem>>
      %113 = tpu.memref_squeeze %112 : memref<1x2x32x128xf32, #tpu.memory_space<vmem>> -> memref<2x32x128xf32, #tpu.memory_space<vmem>>
      %114 = tpu.memref_slice %arg9[%c0_i32_43] : memref<2x!tpu.dma_semaphore, #tpu.memory_space<semaphore_mem>> -> memref<1x!tpu.dma_semaphore, #tpu.memory_space<semaphore_mem>>
      %115 = tpu.memref_squeeze %114 : memref<1x!tpu.dma_semaphore, #tpu.memory_space<semaphore_mem>> -> memref<!tpu.dma_semaphore, #tpu.memory_space<semaphore_mem>>
      tpu.enqueue_dma source(%111 : memref<2x32x128xf32, #tpu.memory_space<any>>) target(%113 : memref<2x32x128xf32, #tpu.memory_space<vmem>>) target_semaphore(%115 : memref<!tpu.dma_semaphore, #tpu.memory_space<semaphore_mem>>)
    } else {
    }
    %c1_i32 = arith.constant 1 : i32
    %3 = arith.addi %arg0, %c1_i32 : i32
    %c3_i32 = arith.constant 3 : i32
    %4 = arith.cmpi slt, %3, %c3_i32 : i32
    %5 = arith.extui %4 : i1 to i32
    %c0_i32_1 = arith.constant 0 : i32
    %6 = arith.cmpi ne, %5, %c0_i32_1 : i32
    scf.if %6 {
      %c1_i32_41 = arith.constant 1 : i32
      %110 = arith.addi %arg0, %c1_i32_41 : i32
      %c1_i32_42 = arith.constant 1 : i32
      %111 = arith.addi %arg0, %c1_i32_42 : i32
      %c2_i32_43 = arith.constant 2 : i32
      %c0_i32_44 = arith.constant 0 : i32
      %112 = arith.cmpi eq, %c2_i32_43, %c0_i32_44 : i32
      %c1_i32_45 = arith.constant 1 : i32
      %113 = arith.select %112, %c1_i32_45, %c2_i32_43 : i32
      %114 = arith.remsi %111, %113 : i32
      %c0_i32_46 = arith.constant 0 : i32
      %115 = arith.cmpi ne, %114, %c0_i32_46 : i32
      %c0_i32_47 = arith.constant 0 : i32
      %116 = arith.cmpi slt, %114, %c0_i32_47 : i32
      %c0_i32_48 = arith.constant 0 : i32
      %117 = arith.cmpi slt, %113, %c0_i32_48 : i32
      %118 = arith.xori %116, %117 : i1
      %119 = arith.andi %118, %115 : i1
      %120 = arith.addi %114, %113 : i32
      %121 = arith.select %119, %120, %114 : i32
      %122 = arith.index_cast %110 : i32 to index
      %123 = memref.load %arg1[%122] : memref<3xi32, #tpu.memory_space<smem>>
      %c0_i32_49 = arith.constant 0 : i32
      %c0_i32_50 = arith.constant 0 : i32
      %124 = tpu.memref_slice %arg4[%c0_i32_49, %123, %c0_i32_50] : memref<2x64x128xf32, #tpu.memory_space<any>> -> memref<2x32x128xf32, #tpu.memory_space<any>>
      %c0_i32_51 = arith.constant 0 : i32
      %c0_i32_52 = arith.constant 0 : i32
      %c0_i32_53 = arith.constant 0 : i32
      %125 = tpu.memref_slice %arg8[%121, %c0_i32_51, %c0_i32_52, %c0_i32_53] : memref<2x2x32x128xf32, #tpu.memory_space<vmem>> -> memref<1x2x32x128xf32, #tpu.memory_space<vmem>>
      %126 = tpu.memref_squeeze %125 : memref<1x2x32x128xf32, #tpu.memory_space<vmem>> -> memref<2x32x128xf32, #tpu.memory_space<vmem>>
      %127 = tpu.memref_slice %arg9[%121] : memref<2x!tpu.dma_semaphore, #tpu.memory_space<semaphore_mem>> -> memref<1x!tpu.dma_semaphore, #tpu.memory_space<semaphore_mem>>
      %128 = tpu.memref_squeeze %127 : memref<1x!tpu.dma_semaphore, #tpu.memory_space<semaphore_mem>> -> memref<!tpu.dma_semaphore, #tpu.memory_space<semaphore_mem>>
      tpu.enqueue_dma source(%124 : memref<2x32x128xf32, #tpu.memory_space<any>>) target(%126 : memref<2x32x128xf32, #tpu.memory_space<vmem>>) target_semaphore(%128 : memref<!tpu.dma_semaphore, #tpu.memory_space<semaphore_mem>>)
    } else {
    }
    %c2_i32 = arith.constant 2 : i32
    %c0_i32_2 = arith.constant 0 : i32
    %7 = arith.cmpi eq, %c2_i32, %c0_i32_2 : i32
    %c1_i32_3 = arith.constant 1 : i32
    %8 = arith.select %7, %c1_i32_3, %c2_i32 : i32
    %9 = arith.remsi %arg0, %8 : i32
    %c0_i32_4 = arith.constant 0 : i32
    %10 = arith.cmpi ne, %9, %c0_i32_4 : i32
    %c0_i32_5 = arith.constant 0 : i32
    %11 = arith.cmpi slt, %9, %c0_i32_5 : i32
    %c0_i32_6 = arith.constant 0 : i32
    %12 = arith.cmpi slt, %8, %c0_i32_6 : i32
    %13 = arith.xori %11, %12 : i1
    %14 = arith.andi %13, %10 : i1
    %15 = arith.addi %9, %8 : i32
    %16 = arith.select %14, %15, %9 : i32
    %17 = arith.index_cast %arg0 : i32 to index
    %18 = memref.load %arg1[%17] : memref<3xi32, #tpu.memory_space<smem>>
    %c0_i32_7 = arith.constant 0 : i32
    %c0_i32_8 = arith.constant 0 : i32
    %19 = tpu.memref_slice %arg4[%c0_i32_7, %18, %c0_i32_8] : memref<2x64x128xf32, #tpu.memory_space<any>> -> memref<2x32x128xf32, #tpu.memory_space<any>>
    %c0_i32_9 = arith.constant 0 : i32
    %c0_i32_10 = arith.constant 0 : i32
    %c0_i32_11 = arith.constant 0 : i32
    %20 = tpu.memref_slice %arg8[%16, %c0_i32_9, %c0_i32_10, %c0_i32_11] : memref<2x2x32x128xf32, #tpu.memory_space<vmem>> -> memref<1x2x32x128xf32, #tpu.memory_space<vmem>>
    %21 = tpu.memref_squeeze %20 : memref<1x2x32x128xf32, #tpu.memory_space<vmem>> -> memref<2x32x128xf32, #tpu.memory_space<vmem>>
    %22 = tpu.memref_slice %arg9[%16] : memref<2x!tpu.dma_semaphore, #tpu.memory_space<semaphore_mem>> -> memref<1x!tpu.dma_semaphore, #tpu.memory_space<semaphore_mem>>
    %23 = tpu.memref_squeeze %22 : memref<1x!tpu.dma_semaphore, #tpu.memory_space<semaphore_mem>> -> memref<!tpu.dma_semaphore, #tpu.memory_space<semaphore_mem>>
    tpu.wait_dma2 semaphore(%23 : memref<!tpu.dma_semaphore, #tpu.memory_space<semaphore_mem>>) src(%19 : memref<2x32x128xf32, #tpu.memory_space<any>>) dst(%21 : memref<2x32x128xf32, #tpu.memory_space<vmem>>)
    %24 = arith.index_cast %arg0 : i32 to index
    %25 = memref.load %arg2[%24] : memref<3xi32, #tpu.memory_space<smem>>
    %26 = arith.index_cast %arg0 : i32 to index
    %27 = memref.load %arg3[%26] : memref<3xi32, #tpu.memory_space<smem>>
    %28 = arith.sitofp %27 : i32 to f32
    %cst = arith.constant 1.280000e+02 : f32
    %29 = arith.mulf %28, %cst : f32
    %cst_12 = arith.constant 1.000000e+00 : f32
    %30 = arith.divf %cst_12, %29 : f32
    %c0 = arith.constant 0 : index
    %c0_13 = arith.constant 0 : index
    %c0_14 = arith.constant 0 : index
    %31 = vector.load %arg5[%c0, %c0_13, %c0_14] : memref<1x32x32xf32, #tpu.memory_space<vmem>>, vector<1x32x32xf32>
    %32 = vector.shape_cast %31 : vector<1x32x32xf32> to vector<32x32xf32>
    %c0_15 = arith.constant 0 : index
    %c0_16 = arith.constant 0 : index
    %c0_17 = arith.constant 0 : index
    %33 = vector.load %arg6[%c0_15, %c0_16, %c0_17] : memref<1x32x2xf32, #tpu.memory_space<vmem>>, vector<1x32x2xf32>
    %34 = vector.shape_cast %33 : vector<1x32x2xf32> to vector<32x2xf32>
    %35 = vector.extract_strided_slice %34 {offsets = [0, 0], sizes = [32, 1], strides = [1, 1]} : vector<32x2xf32> to vector<32x1xf32>
    %36 = vector.extract_strided_slice %34 {offsets = [0, 1], sizes = [32, 1], strides = [1, 1]} : vector<32x2xf32> to vector<32x1xf32>
    %37 = tpu.iota {dimensions = array<i32: 0>} : vector<32x128xi32>
    %38 = vector.broadcast %25 : i32 to vector<32x128xi32>
    %39 = arith.cmpi sge, %37, %38 : vector<32x128xi32>
    %40 = arith.addi %25, %27 : i32
    %41 = vector.broadcast %40 : i32 to vector<32x128xi32>
    %42 = arith.cmpi slt, %37, %41 : vector<32x128xi32>
    %43 = arith.andi %39, %42 : vector<32x128xi1>
    %44 = arith.index_cast %16 : i32 to index
    %c0_18 = arith.constant 0 : index
    %c0_19 = arith.constant 0 : index
    %c0_20 = arith.constant 0 : index
    %45 = vector.load %arg8[%44, %c0_18, %c0_19, %c0_20] : memref<2x2x32x128xf32, #tpu.memory_space<vmem>>, vector<1x1x32x128xf32>
    %46 = vector.shape_cast %45 : vector<1x1x32x128xf32> to vector<32x128xf32>
    %cst_21 = arith.constant 0.000000e+00 : f32
    %47 = vector.broadcast %cst_21 : f32 to vector<32x128xf32>
    %48 = arith.select %43, %46, %47 : vector<32x128xi1>, vector<32x128xf32>
    %49 = vector.shape_cast %48 : vector<32x128xf32> to vector<1x32x128xf32>
    %cst_22 = arith.constant dense<0.000000e+00> : vector<1xf32>
    %50 = vector.multi_reduction <add>, %49, %cst_22 [1, 2] : vector<1x32x128xf32> to vector<1xf32>
    %51 = vector.shape_cast %50 : vector<1xf32> to vector<1x1x1xf32>
    %52 = vector.extract %51[0, 0, 0] : f32 from vector<1x1x1xf32>
    %53 = arith.mulf %48, %48 : vector<32x128xf32>
    %54 = vector.shape_cast %53 : vector<32x128xf32> to vector<1x32x128xf32>
    %cst_23 = arith.constant dense<0.000000e+00> : vector<1xf32>
    %55 = vector.multi_reduction <add>, %54, %cst_23 [1, 2] : vector<1x32x128xf32> to vector<1xf32>
    %56 = vector.shape_cast %55 : vector<1xf32> to vector<1x1x1xf32>
    %57 = vector.extract %56[0, 0, 0] : f32 from vector<1x1x1xf32>
    %58 = arith.mulf %52, %30 : f32
    %59 = arith.mulf %57, %30 : f32
    %60 = arith.mulf %58, %58 : f32
    %61 = arith.subf %59, %60 : f32
    %cst_24 = arith.constant 0.000000e+00 : f32
    %62 = arith.maximumf %61, %cst_24 : f32
    %cst_25 = arith.constant 9.99999974E-6 : f32
    %63 = arith.addf %62, %cst_25 : f32
    %64 = math.rsqrt %63 : f32
    %65 = arith.mulf %64, %58 : f32
    %66 = vector.broadcast %65 : f32 to vector<32x1xf32>
    %67 = arith.mulf %66, %35 : vector<32x1xf32>
    %68 = arith.subf %36, %67 : vector<32x1xf32>
    %cst_26 = arith.constant dense<0.000000e+00> : vector<32x128xf32>
    %69 = tpu.matmul %32, %46, %cst_26 {dimension_numbers = #tpu.dot_dimension_numbers<[1], [0], [0], [1], [0, 0, 1, 1], [], []>} : vector<32x32xf32>, vector<32x128xf32>, vector<32x128xf32> -> vector<32x128xf32>
    %70 = vector.broadcast %64 : f32 to vector<32x128xf32>
    %71 = arith.mulf %69, %70 : vector<32x128xf32>
    %72 = vector.broadcast %68 : vector<32x1xf32> to vector<32x128xf32>
    %73 = arith.addf %71, %72 : vector<32x128xf32>
    %c0_27 = arith.constant 0 : index
    %c0_28 = arith.constant 0 : index
    %c0_29 = arith.constant 0 : index
    %74 = vector.load %arg7[%c0_27, %c0_28, %c0_29] : memref<2x32x128xf32, #tpu.memory_space<vmem>>, vector<1x32x128xf32>
    %75 = vector.shape_cast %74 : vector<1x32x128xf32> to vector<32x128xf32>
    %76 = vector.shape_cast %73 : vector<32x128xf32> to vector<1x32x128xf32>
    tpu.vector_store %arg7[%c0_27, %c0_28, %c0_29], %76 {strides = array<i32>} : memref<2x32x128xf32, #tpu.memory_space<vmem>>, vector<1x32x128xf32>,
    %77 = arith.index_cast %16 : i32 to index
    %c1 = arith.constant 1 : index
    %c0_30 = arith.constant 0 : index
    %c0_31 = arith.constant 0 : index
    %78 = vector.load %arg8[%77, %c1, %c0_30, %c0_31] : memref<2x2x32x128xf32, #tpu.memory_space<vmem>>, vector<1x1x32x128xf32>
    %79 = vector.shape_cast %78 : vector<1x1x32x128xf32> to vector<32x128xf32>
    %cst_32 = arith.constant 0.000000e+00 : f32
    %80 = vector.broadcast %cst_32 : f32 to vector<32x128xf32>
    %81 = arith.select %43, %79, %80 : vector<32x128xi1>, vector<32x128xf32>
    %82 = vector.shape_cast %81 : vector<32x128xf32> to vector<1x32x128xf32>
    %cst_33 = arith.constant dense<0.000000e+00> : vector<1xf32>
    %83 = vector.multi_reduction <add>, %82, %cst_33 [1, 2] : vector<1x32x128xf32> to vector<1xf32>
    %84 = vector.shape_cast %83 : vector<1xf32> to vector<1x1x1xf32>
    %85 = vector.extract %84[0, 0, 0] : f32 from vector<1x1x1xf32>
    %86 = arith.mulf %81, %81 : vector<32x128xf32>
    %87 = vector.shape_cast %86 : vector<32x128xf32> to vector<1x32x128xf32>
    %cst_34 = arith.constant dense<0.000000e+00> : vector<1xf32>
    %88 = vector.multi_reduction <add>, %87, %cst_34 [1, 2] : vector<1x32x128xf32> to vector<1xf32>
    %89 = vector.shape_cast %88 : vector<1xf32> to vector<1x1x1xf32>
    %90 = vector.extract %89[0, 0, 0] : f32 from vector<1x1x1xf32>
    %91 = arith.mulf %85, %30 : f32
    %92 = arith.mulf %90, %30 : f32
    %93 = arith.mulf %91, %91 : f32
    %94 = arith.subf %92, %93 : f32
    %cst_35 = arith.constant 0.000000e+00 : f32
    %95 = arith.maximumf %94, %cst_35 : f32
    %cst_36 = arith.constant 9.99999974E-6 : f32
    %96 = arith.addf %95, %cst_36 : f32
    %97 = math.rsqrt %96 : f32
    %98 = arith.mulf %97, %91 : f32
    %99 = vector.broadcast %98 : f32 to vector<32x1xf32>
    %100 = arith.mulf %99, %35 : vector<32x1xf32>
    %101 = arith.subf %36, %100 : vector<32x1xf32>
    %cst_37 = arith.constant dense<0.000000e+00> : vector<32x128xf32>
    %102 = tpu.matmul %32, %79, %cst_37 {dimension_numbers = #tpu.dot_dimension_numbers<[1], [0], [0], [1], [0, 0, 1, 1], [], []>} : vector<32x32xf32>, vector<32x128xf32>, vector<32x128xf32> -> vector<32x128xf32>
    %103 = vector.broadcast %97 : f32 to vector<32x128xf32>
    %104 = arith.mulf %102, %103 : vector<32x128xf32>
    %105 = vector.broadcast %101 : vector<32x1xf32> to vector<32x128xf32>
    %106 = arith.addf %104, %105 : vector<32x128xf32>
    %c1_38 = arith.constant 1 : index
    %c0_39 = arith.constant 0 : index
    %c0_40 = arith.constant 0 : index
    %107 = vector.load %arg7[%c1_38, %c0_39, %c0_40] : memref<2x32x128xf32, #tpu.memory_space<vmem>>, vector<1x32x128xf32>
    %108 = vector.shape_cast %107 : vector<1x32x128xf32> to vector<32x128xf32>
    %109 = vector.shape_cast %106 : vector<32x128xf32> to vector<1x32x128xf32>
    tpu.vector_store %arg7[%c1_38, %c0_39, %c0_40], %109 {strides = array<i32>} : memref<2x32x128xf32, #tpu.memory_space<vmem>>, vector<1x32x128xf32>,
    return
  }
  func.func @transform_1(%arg0: i32, %arg1: memref<3xi32, #tpu.memory_space<smem>>, %arg2: memref<3xi32, #tpu.memory_space<smem>>, %arg3: memref<3xi32, #tpu.memory_space<smem>>) -> (i32, i32, i32) {
    %c0_i32 = arith.constant 0 : i32
    %c0_i32_0 = arith.constant 0 : i32
    %c0_i32_1 = arith.constant 0 : i32
    return %arg0, %c0_i32, %c0_i32_0 : i32, i32, i32
  }
  func.func @transform_2(%arg0: i32, %arg1: memref<3xi32, #tpu.memory_space<smem>>, %arg2: memref<3xi32, #tpu.memory_space<smem>>, %arg3: memref<3xi32, #tpu.memory_space<smem>>) -> (i32, i32, i32) {
    %c0_i32 = arith.constant 0 : i32
    %c0_i32_0 = arith.constant 0 : i32
    %c0_i32_1 = arith.constant 0 : i32
    return %arg0, %c0_i32, %c0_i32_0 : i32, i32, i32
  }
  func.func @transform_3(%arg0: i32, %arg1: memref<3xi32, #tpu.memory_space<smem>>, %arg2: memref<3xi32, #tpu.memory_space<smem>>, %arg3: memref<3xi32, #tpu.memory_space<smem>>) -> (i32, i32, i32) {
    %c0_i32 = arith.constant 0 : i32
    %c0_i32_0 = arith.constant 0 : i32
    %c0_i32_1 = arith.constant 0 : i32
    return %c0_i32, %c0_i32_0, %arg0 : i32, i32, i32
  }
}

</mosaic_0001>

<llo_original>
// kernel: _lambda_.1
$region0: #{_lambda_.1}
  #allocation0 [shape = 'u32[]', space=smem, size = 0x4, offset = 0x4, fixed_abs, tag = 'smem constant byte address 0x4 - core index']
  #allocation1 [shape = 'u32[144,128]{1,0:T(1,128)}', space=vmem, size = 0x12000, scoped, tag = 'internal scratch']
  #allocation2 [shape = 'f32[2,2,32,128]{3,2,1,0:T(8,128)}', space=vmem, size = 0x10000, scoped, tag = 'scratch operand']
  #allocation3 [shape = 's32[2]{0}', space=sflag, size = 0x8, scoped, tag = 'scratch operand']
  #allocation4 [shape = 's32[1]{0}', space=sflag, size = 0x4, scoped, tag = 'scoped memory for _lambda_.1']
  #allocation5 [shape = 'u8[512]{0}', space=smem, size = 0x200, scoped, tag = 'prefetched SMEM operand 0']
  #allocation6 [shape = 'u8[512]{0}', space=smem, size = 0x200, scoped, tag = 'prefetched SMEM operand 1']
  #allocation7 [shape = 'u8[512]{0}', space=smem, size = 0x200, scoped, tag = 'prefetched SMEM operand 2']
  #allocation9 [shape = 's32[]', space=sflag, size = 0x4, offset = 0, fixed_abs, tag = 'sflag constant byte address 0x0 - dummy sync flag']
  #allocation10 [shape = 's32[]', space=sflag, size = 0x4, offset = 0, fixed_abs, tag = 'sflag constant byte address 0x0 - dummy sync flag']
  %s0 = inlined_call_operand.vmem [shape: s32[3], index: 0, kind: input, shape index: {}]
  %s1 = inlined_call_operand.vmem [shape: s32[3], index: 1, kind: input, shape index: {}]
  %s2 = inlined_call_operand.vmem [shape: s32[3], index: 2, kind: input, shape index: {}]
  %s3 = inlined_call_operand.vmem [shape: f32[2,64,128], index: 3, kind: input, shape index: {}]
  %s4 = inlined_call_operand.vmem [shape: f32[3,32,32], index: 4, kind: input, shape index: {}]
  %s5 = inlined_call_operand.vmem [shape: f32[3,32,2], index: 5, kind: input, shape index: {}]
  %s6 = inlined_call_operand.vmem [shape: f32[2,32,384], index: 6, kind: output, shape index: {}]
  %s7 = sld [smem:[#allocation0]]
  $region151: #{_lambda_.1} parent=0
    _
  %s9 = ssub.s32 1, %s7
  %s10 = scalar_select 0, %s9, %s7
  %s11 = sshll.u32 %s0, 4
  %s12 = int_to_ptr.vmem [resolvable:$true] %s11
  %14 = dma.vmem_to_smem %s12, 16, [#allocation5], [#allocation4]
  %s15 = sshll.u32 %s1, 4
  %s16 = int_to_ptr.vmem [resolvable:$true] %s15
  %18 = dma.vmem_to_smem %s16, 16, [#allocation6], [#allocation4]
  %s19 = sshll.u32 %s2, 4
  %s20 = int_to_ptr.vmem [resolvable:$true] %s19
  %22 = dma.vmem_to_smem %s20, 16, [#allocation7], [#allocation4]
  %23 = dma.done [#allocation4], 48
  %24 = sfence
  $region1: #{_lambda_.1} parent=0
    #allocation8 [shape = 'u8[65536]{0}', space=vmem, size = 0x10000, scoped, tag = 'output window, operand 0']
    loop: start=0, step=1, limit=5
    $region2: #{_lambda_.1} parent=1 // loop_pre_header
      _
    $region3: #{_lambda_.1} parent=1 // loop_header
      %s26 = sphi 0, %s30
      %p27 = scmp.ge.s32.totalorder %s26, 5
      %s36 = sphi 0, %s38
      %s39 = sphi 0, %s36
      %s40 = sphi 0, %s39
      %s56 = sphi 0, %s40
      %s62 = sphi 0, %s64
      %s65 = sphi 0, %s62
      %s66 = sphi 0, %s65
      %s82 = sphi 0, %s66
      %s88 = sphi 0, %s90
      %s91 = sphi 0, %s88
      %s92 = sphi 0, %s91
      %s108 = sphi 0, %s92
    $region4: #{_lambda_.1} parent=1 // loop_header_branch
      %29 = sbr.rel (%p27) target = $region8
    $region5: #{_lambda_.1} parent=1 // loop_body
      %s31 = ssub.s32 %s26, 1
      %s32 = ssub.s32 %s26, 2
      %s33 = sadd.s32 %s26, 1
      %s34 = ssub.s32 %s26, %s33
      %p35 = scmp.eq.s32.totalorder %s34, 0
      %s37 = sadd.s32 %s36, 1
      %s38 = scalar_select %p35, %s36, %s37
      %p41 = pneg %p35
      %p42 = scmp.eq.s32.totalorder %s26, 2
      %p43 = por %p41, %p42
      %p44 = scmp.ne.s32.totalorder %s36, %s39
      %p45 = scmp.eq.s32.totalorder %s26, 0
      %p46 = por %p44, %p45
      %p47 = scmp.ne.s32.totalorder %s36, %s39
      %p48 = scmp.eq.s32.totalorder %s31, 2
      %p49 = por %p47, %p48
      %p50 = scmp.ne.s32.totalorder %s39, %s40
      %p51 = scmp.eq.s32.totalorder %s31, 0
      %p52 = por %p50, %p51
      %p53 = scmp.ne.s32.totalorder %s39, %s40
      %p54 = scmp.eq.s32.totalorder %s32, 2
      %p55 = por %p53, %p54
      %p57 = scmp.ne.s32.totalorder %s40, %s56
      %p58 = scmp.eq.s32.totalorder %s32, 0
      %p59 = por %p57, %p58
      %s60 = ssub.s32 %s26, %s33
      %p61 = scmp.eq.s32.totalorder %s60, 0
      %s63 = sadd.s32 %s62, 1
      %s64 = scalar_select %p61, %s62, %s63
      %p67 = pneg %p61
      %p68 = scmp.eq.s32.totalorder %s26, 2
      %p69 = por %p67, %p68
      %p70 = scmp.ne.s32.totalorder %s62, %s65
      %p71 = scmp.eq.s32.totalorder %s26, 0
      %p72 = por %p70, %p71
      %p73 = scmp.ne.s32.totalorder %s62, %s65
      %p74 = scmp.eq.s32.totalorder %s31, 2
      %p75 = por %p73, %p74
      %p76 = scmp.ne.s32.totalorder %s65, %s66
      %p77 = scmp.eq.s32.totalorder %s31, 0
      %p78 = por %p76, %p77
      %p79 = scmp.ne.s32.totalorder %s65, %s66
      %p80 = scmp.eq.s32.totalorder %s32, 2
      %p81 = por %p79, %p80
      %p83 = scmp.ne.s32.totalorder %s66, %s82
      %p84 = scmp.eq.s32.totalorder %s32, 0
      %p85 = por %p83, %p84
      %s86 = ssub.s32 %s26, %s33
      %p87 = scmp.eq.s32.totalorder %s86, 0
      %s89 = sadd.s32 %s88, 1
      %s90 = scalar_select %p87, %s88, %s89
      %p93 = pneg %p87
      %p94 = scmp.eq.s32.totalorder %s26, 2
      %p95 = por %p93, %p94
      %p96 = scmp.ne.s32.totalorder %s88, %s91
      %p97 = scmp.eq.s32.totalorder %s26, 0
      %p98 = por %p96, %p97
      %p99 = scmp.ne.s32.totalorder %s88, %s91
      %p100 = scmp.eq.s32.totalorder %s31, 2
      %p101 = por %p99, %p100
      %p102 = scmp.ne.s32.totalorder %s91, %s92
      %p103 = scmp.eq.s32.totalorder %s31, 0
      %p104 = por %p102, %p103
      %p105 = scmp.ne.s32.totalorder %s91, %s92
      %p106 = scmp.eq.s32.totalorder %s32, 2
      %p107 = por %p105, %p106
      %p109 = scmp.ne.s32.totalorder %s92, %s108
      %p110 = scmp.eq.s32.totalorder %s32, 0
      %p111 = por %p109, %p110
      %p112 = scmp.le.s32.totalorder 1, %s26
      %p113 = scmp.lt.s32.totalorder %s26, 4
      %p114 = pnand %p112, %p113
      %p115 = pneg %p114
      // Predicated region
      $region9: #{_lambda_.1} parent=5 // pred_check
        _
      $region10: #{_lambda_.1} parent=5 // pred_check_branch
        %117 = sbr.rel (%p114) target = $region12
      $region11: #{_lambda_.1} parent=5 // pred_region
        %s118 = ssub.s32 %s26, 1
      $region12: #{_lambda_.1} parent=5 // pred_fallthru
        _
      %p119 = scmp.lt.s32.totalorder %s26, 3
      // Predicated region
      $region13: #{_lambda_.1} parent=5 // pred_check
        %p120 = pneg %p119
      $region14: #{_lambda_.1} parent=5 // pred_check_branch
        %122 = sbr.rel (%p120) target = $region16
      $region15: #{_lambda_.1} parent=5 // pred_region
        // Predicated region
        $region17: #{_lambda_.1} parent=15 // pred_check
          %p123 = pneg %p46
        $region18: #{_lambda_.1} parent=15 // pred_check_branch
          %125 = sbr.rel (%p123) target = $region20
        $region19: #{_lambda_.1} parent=15 // pred_region
          %p126 = scmp.lt.s32.totalorder %s26, 2
          %s127 = scalar_select %p126, %s26, 2
          %s128 = smul.addr %s127, 4
          %s129 = smul.addr %s128, 8
          %s130 = scalar_lea.vmem %s4, %s129
        $region20: #{_lambda_.1} parent=15 // pred_fallthru
          _
        // Predicated region
        $region21: #{_lambda_.1} parent=15 // pred_check
          %p131 = pneg %p72
        $region22: #{_lambda_.1} parent=15 // pred_check_branch
          %133 = sbr.rel (%p131) target = $region24
        $region23: #{_lambda_.1} parent=15 // pred_region
          %p134 = scmp.lt.s32.totalorder %s26, 2
          %s135 = scalar_select %p134, %s26, 2
          %s136 = smul.addr %s135, 4
          %s137 = smul.addr %s136, 8
          %s138 = scalar_lea.vmem %s5, %s137
        $region24: #{_lambda_.1} parent=15 // pred_fallthru
          _
      $region16: #{_lambda_.1} parent=5 // pred_fallthru
        _
      %p139 = scmp.le.s32.totalorder 1, %s26
      %p140 = scmp.lt.s32.totalorder %s26, 4
      %p141 = pnand %p139, %p140
      %p142 = pneg %p141
      // Predicated region
      $region25: #{_lambda_.1} parent=5 // pred_check
        _
      $region26: #{_lambda_.1} parent=5 // pred_check_branch
        %144 = sbr.rel (%p141) target = $region28
      $region27: #{_lambda_.1} parent=5 // pred_region
        %s145 = ssub.s32 %s26, 1
        %p146 = scmp.lt.s32.totalorder %s31, 2
        %s147 = scalar_select %p146, %s31, 2
        %s148 = smul.addr %s147, 4
        %s149 = smul.addr %s148, 8
        %s150 = scalar_lea.vmem %s4, %s149
        %p151 = pneg %p52
        %p152 = pneg %p49
        %p153 = scmp.lt.s32.totalorder %s31, 2
        %s154 = scalar_select %p153, %s31, 2
        %s155 = smul.addr %s154, 4
        %s156 = smul.addr %s155, 8
        %s157 = scalar_lea.vmem %s5, %s156
        %p158 = pneg %p78
        %p159 = pneg %p75
        %p160 = pneg %p104
        %p161 = pneg %p101
        %s162 = sand.u32 %s91, 1
        %s163 = sand.u32 %s91, 1
        %s164 = smul.addr %s163, 64
        %s165 = scalar_lea.vmem [#allocation8], %s164
        %p166 = scmp.lt.s32.totalorder %s31, 2
        %s167 = scalar_select %p166, %s31, 2
        %s168 = smul.addr %s167, 4
        %s169 = smul.addr %s168, 8
        %s170 = scalar_lea.vmem %s4, %s169
        %p171 = scmp.lt.s32.totalorder %s31, 2
        %s172 = scalar_select %p171, %s31, 2
        %s173 = smul.addr %s172, 4
        %s174 = smul.addr %s173, 8
        %s175 = scalar_lea.vmem %s5, %s174
        %p176 = scmp.eq.s32.totalorder %s31, 0
        // Predicated region
        $region29: #{_lambda_.1} parent=27 // pred_check
          %p177 = pneg %p176
        $region30: #{_lambda_.1} parent=27 // pred_check_branch
          %179 = sbr.rel (%p177) target = $region32
        $region31: #{_lambda_.1} parent=27 // pred_region
          %s180 = sld [smem:[#allocation5]]
          %s181 = scalar_lea.vmem %s3, %s180
          %p183 = scmp.lt.u32.totalorder 32, 8
          %p184 = pneg %p183
          // Predicated region
          $region33: #{_lambda_.1} parent=31 // pred_check
            _
          $region34: #{_lambda_.1} parent=31 // pred_check_branch
            %186 = sbr.rel (%p183) target = $region36
          $region35: #{_lambda_.1} parent=31 // pred_region
            %s204 = sand.u32 32, 7
            %p205 = scmp.eq.s32.totalorder %s204, 0
            // Predicated region
            $region48: #{_lambda_.1} parent=35 // pred_check
              %p206 = pneg %p205
            $region49: #{_lambda_.1} parent=35 // pred_check_branch
              %208 = sbr.rel (%p206) target = $region51
            $region50: #{_lambda_.1} parent=35 // pred_region
              loop: start=0, step=1, limit=1
              $region52: #{_lambda_.1} parent=50 // loop_pre_header
                _
              $region53: #{_lambda_.1} parent=50 // loop_header
                %s210 = sphi 0, %s214
                %p211 = scmp.ge.s32.totalorder %s210, 1
                %s215 = sphi %s181, %s181
                %s216 = sphi [#allocation2], [#allocation2]
              $region54: #{_lambda_.1} parent=50 // loop_header_branch
                %213 = sbr.rel (%p211) target = $region58
              $region55: #{_lambda_.1} parent=50 // loop_body
                %v217 = vld [vmem:[%s215] sm:$0xff]
                %218 = vst [vmem:[%s216] sm:$0xff] %v217
                %v219 = vld [vmem:[%s215 + $0x8] sm:$0xff]
                %220 = vst [vmem:[%s216 + $0x8] sm:$0xff] %v219
                %v221 = vld [vmem:[%s215 + $0x10] sm:$0xff]
                %222 = vst [vmem:[%s216 + $0x10] sm:$0xff] %v221
                %v223 = vld [vmem:[%s215 + $0x18] sm:$0xff]
                %224 = vst [vmem:[%s216 + $0x18] sm:$0xff] %v223
                %v225 = vld [vmem:[%s215 + $0x40] sm:$0xff]
                %226 = vst [vmem:[%s216 + $0x20] sm:$0xff] %v225
                %v227 = vld [vmem:[%s215 + $0x48] sm:$0xff]
                %228 = vst [vmem:[%s216 + $0x28] sm:$0xff] %v227
                %v229 = vld [vmem:[%s215 + $0x50] sm:$0xff]
                %230 = vst [vmem:[%s216 + $0x30] sm:$0xff] %v229
                %v231 = vld [vmem:[%s215 + $0x58] sm:$0xff]
                %232 = vst [vmem:[%s216 + $0x38] sm:$0xff] %v231
              $region56: #{_lambda_.1} parent=50 // loop_footer
                %s214 = sadd.s32 1, %s210
              $region57: #{_lambda_.1} parent=50 // loop_footer_branch
                %209 = sbr.rel target = $region53
              $region58: #{_lambda_.1} parent=50 // loop_exit
                _
            $region51: #{_lambda_.1} parent=35 // pred_fallthru
              _
            %p233 = pneg %p205
            // Predicated region
            $region59: #{_lambda_.1} parent=35 // pred_check
              _
            $region60: #{_lambda_.1} parent=35 // pred_check_branch
              %235 = sbr.rel (%p205) target = $region62
            $region61: #{_lambda_.1} parent=35 // pred_region
              %s236 = sand.u32 32, 7
            $region62: #{_lambda_.1} parent=35 // pred_fallthru
              _
          $region36: #{_lambda_.1} parent=31 // pred_fallthru
            _
          // Predicated region
          $region37: #{_lambda_.1} parent=31 // pred_check
            %p187 = pneg %p183
          $region38: #{_lambda_.1} parent=31 // pred_check_branch
            %189 = sbr.rel (%p187) target = $region40
          $region39: #{_lambda_.1} parent=31 // pred_region
            %s190 = sshll.u32 1, 32
            %s191 = ssub.s32 %s190, 1
            loop: start=0, step=1, limit=1
            $region41: #{_lambda_.1} parent=39 // loop_pre_header
              _
            $region42: #{_lambda_.1} parent=39 // loop_header
              %s193 = sphi 0, %s197
              %p194 = scmp.ge.s32.totalorder %s193, 1
              %s198 = sphi %s181, %s181
              %s199 = sphi [#allocation2], [#allocation2]
            $region43: #{_lambda_.1} parent=39 // loop_header_branch
              %196 = sbr.rel (%p194) target = $region47
            $region44: #{_lambda_.1} parent=39 // loop_body
              %v200 = vld [vmem:[%s198] sm:%s191]
              %201 = vst [vmem:[%s199] sm:%s191] %v200
              %v202 = vld [vmem:[%s198 + $0x40] sm:%s191]
              %203 = vst [vmem:[%s199 + $0x20] sm:%s191] %v202
            $region45: #{_lambda_.1} parent=39 // loop_footer
              %s197 = sadd.s32 1, %s193
            $region46: #{_lambda_.1} parent=39 // loop_footer_branch
              %192 = sbr.rel target = $region42
            $region47: #{_lambda_.1} parent=39 // loop_exit
              _
          $region40: #{_lambda_.1} parent=31 // pred_fallthru
            _
          // Predicated region
          $region63: #{_lambda_.1} parent=31 // pred_check
            _
          $region64: #{_lambda_.1} parent=31 // pred_check_branch
            %239 = sbr.rel (0) target = $region66
          $region65: #{_lambda_.1} parent=31 // pred_region
            %240 = vsyncadd [#allocation3], 1024
          $region66: #{_lambda_.1} parent=31 // pred_fallthru
            _
        $region32: #{_lambda_.1} parent=27 // pred_fallthru
          _
        %s241 = sadd.s32 %s31, 1
        %p242 = scmp.lt.s32.totalorder %s241, 3
        // Predicated region
        $region67: #{_lambda_.1} parent=27 // pred_check
          %p243 = pneg %p242
        $region68: #{_lambda_.1} parent=27 // pred_check_branch
          %245 = sbr.rel (%p243) target = $region70
        $region69: #{_lambda_.1} parent=27 // pred_region
          %p246 = scmp.lt.s32.totalorder %s241, 0
          %s247 = ssub.s32 0, %s241
          %s248 = scalar_select %p246, %s247, %s241
          %s249 = sand.u32 %s248, 1
          %s250 = ssub.s32 0, %s249
          %s251 = scalar_select %p246, %s250, %s249
          %p252 = scmp.ne.s32.totalorder %s251, 0
          %p253 = scmp.lt.s32.totalorder %s251, 0
          %p254 = pnand %p253, %p252
          %p255 = pneg %p254
          %s256 = sadd.s32 %s251, 2
          %s257 = scalar_select %p255, %s256, %s251
          %s258 = sld [smem:[#allocation5 + %s241]]
          %s259 = scalar_lea.vmem %s3, %s258
          %s260 = smul.u32 %s257, 64
          %s261 = scalar_lea.vmem [#allocation2], %s260
          %s262 = scalar_lea.sflag [#allocation3], %s257
          %p264 = scmp.lt.u32.totalorder 32, 8
          %p265 = pneg %p264
          // Predicated region
          $region71: #{_lambda_.1} parent=69 // pred_check
            _
          $region72: #{_lambda_.1} parent=69 // pred_check_branch
            %267 = sbr.rel (%p264) target = $region74
          $region73: #{_lambda_.1} parent=69 // pred_region
            %s285 = sand.u32 32, 7
            %p286 = scmp.eq.s32.totalorder %s285, 0
            // Predicated region
            $region86: #{_lambda_.1} parent=73 // pred_check
              %p287 = pneg %p286
            $region87: #{_lambda_.1} parent=73 // pred_check_branch
              %289 = sbr.rel (%p287) target = $region89
            $region88: #{_lambda_.1} parent=73 // pred_region
              loop: start=0, step=1, limit=1
              $region90: #{_lambda_.1} parent=88 // loop_pre_header
                _
              $region91: #{_lambda_.1} parent=88 // loop_header
                %s291 = sphi 0, %s295
                %p292 = scmp.ge.s32.totalorder %s291, 1
                %s296 = sphi %s259, %s259
                %s297 = sphi %s261, %s261
              $region92: #{_lambda_.1} parent=88 // loop_header_branch
                %294 = sbr.rel (%p292) target = $region96
              $region93: #{_lambda_.1} parent=88 // loop_body
                %v298 = vld [vmem:[%s296] sm:$0xff]
                %299 = vst [vmem:[%s297] sm:$0xff] %v298
                %v300 = vld [vmem:[%s296 + $0x8] sm:$0xff]
                %301 = vst [vmem:[%s297 + $0x8] sm:$0xff] %v300
                %v302 = vld [vmem:[%s296 + $0x10] sm:$0xff]
                %303 = vst [vmem:[%s297 + $0x10] sm:$0xff] %v302
                %v304 = vld [vmem:[%s296 + $0x18] sm:$0xff]
                %305 = vst [vmem:[%s297 + $0x18] sm:$0xff] %v304
                %v306 = vld [vmem:[%s296 + $0x40] sm:$0xff]
                %307 = vst [vmem:[%s297 + $0x20] sm:$0xff] %v306
                %v308 = vld [vmem:[%s296 + $0x48] sm:$0xff]
                %309 = vst [vmem:[%s297 + $0x28] sm:$0xff] %v308
                %v310 = vld [vmem:[%s296 + $0x50] sm:$0xff]
                %311 = vst [vmem:[%s297 + $0x30] sm:$0xff] %v310
                %v312 = vld [vmem:[%s296 + $0x58] sm:$0xff]
                %313 = vst [vmem:[%s297 + $0x38] sm:$0xff] %v312
              $region94: #{_lambda_.1} parent=88 // loop_footer
                %s295 = sadd.s32 1, %s291
              $region95: #{_lambda_.1} parent=88 // loop_footer_branch
                %290 = sbr.rel target = $region91
              $region96: #{_lambda_.1} parent=88 // loop_exit
                _
            $region89: #{_lambda_.1} parent=73 // pred_fallthru
              _
            %p314 = pneg %p286
            // Predicated region
            $region97: #{_lambda_.1} parent=73 // pred_check
              _
            $region98: #{_lambda_.1} parent=73 // pred_check_branch
              %316 = sbr.rel (%p286) target = $region100
            $region99: #{_lambda_.1} parent=73 // pred_region
              %s317 = sand.u32 32, 7
            $region100: #{_lambda_.1} parent=73 // pred_fallthru
              _
          $region74: #{_lambda_.1} parent=69 // pred_fallthru
            _
          // Predicated region
          $region75: #{_lambda_.1} parent=69 // pred_check
            %p268 = pneg %p264
          $region76: #{_lambda_.1} parent=69 // pred_check_branch
            %270 = sbr.rel (%p268) target = $region78
          $region77: #{_lambda_.1} parent=69 // pred_region
            %s271 = sshll.u32 1, 32
            %s272 = ssub.s32 %s271, 1
            loop: start=0, step=1, limit=1
            $region79: #{_lambda_.1} parent=77 // loop_pre_header
              _
            $region80: #{_lambda_.1} parent=77 // loop_header
              %s274 = sphi 0, %s278
              %p275 = scmp.ge.s32.totalorder %s274, 1
              %s279 = sphi %s259, %s259
              %s280 = sphi %s261, %s261
            $region81: #{_lambda_.1} parent=77 // loop_header_branch
              %277 = sbr.rel (%p275) target = $region85
            $region82: #{_lambda_.1} parent=77 // loop_body
              %v281 = vld [vmem:[%s279] sm:%s272]
              %282 = vst [vmem:[%s280] sm:%s272] %v281
              %v283 = vld [vmem:[%s279 + $0x40] sm:%s272]
              %284 = vst [vmem:[%s280 + $0x20] sm:%s272] %v283
            $region83: #{_lambda_.1} parent=77 // loop_footer
              %s278 = sadd.s32 1, %s274
            $region84: #{_lambda_.1} parent=77 // loop_footer_branch
              %273 = sbr.rel target = $region80
            $region85: #{_lambda_.1} parent=77 // loop_exit
              _
          $region78: #{_lambda_.1} parent=69 // pred_fallthru
            _
          // Predicated region
          $region101: #{_lambda_.1} parent=69 // pred_check
            _
          $region102: #{_lambda_.1} parent=69 // pred_check_branch
            %320 = sbr.rel (0) target = $region104
          $region103: #{_lambda_.1} parent=69 // pred_region
            %321 = vsyncadd %s262, 1024
          $region104: #{_lambda_.1} parent=69 // pred_fallthru
            _
        $region70: #{_lambda_.1} parent=27 // pred_fallthru
          _
        %p322 = scmp.lt.s32.totalorder %s31, 0
        %s323 = ssub.s32 0, %s31
        %s324 = scalar_select %p322, %s323, %s31
        %s325 = sand.u32 %s324, 1
        %s326 = ssub.s32 0, %s325
        %s327 = scalar_select %p322, %s326, %s325
        %p328 = scmp.ne.s32.totalorder %s327, 0
        %p329 = scmp.lt.s32.totalorder %s327, 0
        %p330 = pnand %p329, %p328
        %p331 = pneg %p330
        %s332 = sadd.s32 %s327, 2
        %s333 = scalar_select %p331, %s332, %s327
        %s334 = sld [smem:[#allocation5 + %s31]]
        %s335 = scalar_lea.sflag [#allocation3], %s333
        %s336 = smul.u32 2, 32
        %s337 = smul.u32 %s336, 1
        %s338 = sshll.u32 %s337, 4
        %339 = dma.done %s335, %s338
        %s340 = sld [smem:[#allocation6 + %s31]]
        %s341 = sld [smem:[#allocation7 + %s31]]
        %s342 = scvt.s32.f32 %s341
        %s343 = smul.f32 %s342, 128.0
        %v344 = vstv %s343
        %v345 = vrcp.pop %v344
        %s346 = vtos %v345
        %v347 = vld [vmem:[%s170] sm:$0xff]
        %v348 = vld [vmem:[%s170 + $0x8] sm:$0xff]
        %v349 = vld [vmem:[%s170 + $0x10] sm:$0xff]
        %v350 = vld [vmem:[%s170 + $0x18] sm:$0xff]
        %v351 = vld [vmem:[%s175] sm:$0xff]
        %v352 = vld [vmem:[%s175 + $0x8] sm:$0xff]
        %v353 = vld [vmem:[%s175 + $0x10] sm:$0xff]
        %v354 = vld [vmem:[%s175 + $0x18] sm:$0xff]
        %v355 = vlaneseq
        %v356 = vshrl.u32 %v355, 7
        %v357 = vadd.s32 %v356, 8
        %v358 = vadd.s32 %v356, 16
        %v359 = vadd.s32 %v356, 24
        %v360 = vstv %s340
        %vm361 = vcmp.ge.s32.totalorder %v356, %v360
        %vm362 = vcmp.ge.s32.totalorder %v357, %v360
        %vm363 = vcmp.ge.s32.totalorder %v358, %v360
        %vm364 = vcmp.ge.s32.totalorder %v359, %v360
        %s365 = sadd.s32 %s340, %s341
        %v366 = vstv %s365
        %vm367 = vcmp.lt.s32.totalorder %v356, %v366
        %vm368 = vcmp.lt.s32.totalorder %v357, %v366
        %vm369 = vcmp.lt.s32.totalorder %v358, %v366
        %vm370 = vcmp.lt.s32.totalorder %v359, %v366
        %vm371 = vmand %vm361, %vm367
        %vm372 = vmand %vm362, %vm368
        %vm373 = vmand %vm363, %vm369
        %vm374 = vmand %vm364, %vm370
        %s375 = smul.u32 %s333, 64
        %s376 = scalar_lea.vmem [#allocation2], %s375
        %v377 = vld [vmem:[%s376] sm:$0xff]
        %v378 = vld [vmem:[%s376 + $0x8] sm:$0xff]
        %v379 = vld [vmem:[%s376 + $0x10] sm:$0xff]
        %v380 = vld [vmem:[%s376 + $0x18] sm:$0xff]
        %v381 = vsel %vm371, %v377, 0.0
        %v382 = vsel %vm372, %v378, 0.0
        %v383 = vsel %vm373, %v379, 0.0
        %v384 = vsel %vm374, %v380, 0.0
        %v385 = vadd.f32 %v381, %v382
        %v386 = vadd.f32 %v385, %v383
        %v387 = vadd.f32 %v386, %v384
        %388 = vadd.xlane.f32.xlu0 %v387
        %v389 = vpop.xlane.xlu0 %388
        %v390 = vrot.slane %v389, 4
        %v391 = vadd.f32 %v389, %v390
        %v392 = vrot.slane %v391, 2
        %v393 = vadd.f32 %v391, %v392
        %v394 = vrot.slane %v393, 1
        %v395 = vadd.f32 %v393, %v394
        %s396 = vtos %v395
        %v397 = vmul.f32 %v381, %v381
        %v398 = vmul.f32 %v382, %v382
        %v399 = vmul.f32 %v383, %v383
        %v400 = vmul.f32 %v384, %v384
        %v401 = vadd.f32 %v397, %v398
        %v402 = vadd.f32 %v401, %v399
        %v403 = vadd.f32 %v402, %v400
        %404 = vadd.xlane.f32.xlu0 %v403
        %v405 = vpop.xlane.xlu0 %404
        %v406 = vrot.slane %v405, 4
        %v407 = vadd.f32 %v405, %v406
        %v408 = vrot.slane %v407, 2
        %v409 = vadd.f32 %v407, %v408
        %v410 = vrot.slane %v409, 1
        %v411 = vadd.f32 %v409, %v410
        %s412 = vtos %v411
        %s413 = smul.f32 %s396, %s346
        %s414 = smul.f32 %s412, %s346
        %s415 = smul.f32 %s413, %s413
        %s416 = ssub.f32 %s414, %s415
        %s417 = smax.f32 %s416, 0.0
        %s418 = sadd.f32 %s417, 1e-05
        %v419 = vstv %s418
        %v420 = vrsqrt.pop %v419
        %s421 = vtos %v420
        %s422 = smul.f32 %s421, %s413
        %v423 = vstv %s422
        %v424 = vmul.f32 %v423, %v351
        %v425 = vmul.f32 %v423, %v352
        %v426 = vmul.f32 %v423, %v353
        %v427 = vmul.f32 %v423, %v354
        %432 = vrot.lane.b32.xlu0 %v424, 1
        %v433 = vpop.permute.xlu0 %432
        %434 = vrot.lane.b32.xlu0 %v425, 1
        %v435 = vpop.permute.xlu0 %434
        %436 = vrot.lane.b32.xlu0 %v426, 1
        %v437 = vpop.permute.xlu0 %436
        %438 = vrot.lane.b32.xlu0 %v427, 1
        %v439 = vpop.permute.xlu0 %438
        %v444 = vsub.f32 %v351, %v433
        %v445 = vsub.f32 %v352, %v435
        %v446 = vsub.f32 %v353, %v437
        %v447 = vsub.f32 %v354, %v439
        %vm448 = vcmask 261120
        %v450 = vsel %vm448, %v347, 0
        %v453 = vsel %vm448, %v348, 0
        %v456 = vsel %vm448, %v349, 0
        %v459 = vsel %vm448, %v350, 0
        %461 = vmatprep.subr.mxu0 0.0
        %462 = vmatpush1.msra.mxu0 0.0
        %463 = vmatprep.subr.mxu0 0.0
        %464 = vmatpush1.msra.mxu0 0.0
        %465 = vmatprep.subr.mxu0 0.0
        %466 = vmatpush1.msra.mxu0 0.0
        %467 = vmatprep.subr.mxu0 0.0
        %468 = vmatpush1.msra.mxu0 0.0
        %469 = vmatprep.subr.mxu0 0.0
        %470 = vmatpush1.msra.mxu0 0.0
        %471 = vmatprep.subr.mxu0 0.0
        %472 = vmatpush1.msra.mxu0 0.0
        %473 = vmatprep.subr.mxu0 0.0
        %474 = vmatpush1.msra.mxu0 0.0
        %475 = vmatprep.subr.mxu0 0.0
        %476 = vmatpush1.msra.mxu0 0.0
        %477 = vmatprep.subr.mxu0 0.0
        %478 = vmatpush1.msra.mxu0 0.0
        %479 = vmatprep.subr.mxu0 0.0
        %480 = vmatpush1.msra.mxu0 0.0
        %481 = vmatprep.subr.mxu0 0.0
        %482 = vmatpush1.msra.mxu0 0.0
        %483 = vmatprep.subr.mxu0 0.0
        %484 = vmatpush1.msra.mxu0 0.0
        %485 = vmatprep.subr.mxu0 0.0
        %486 = vmatpush1.msra.mxu0 %v380
        %487 = vmatprep.subr.mxu0 0.0
        %488 = vmatpush1.msra.mxu0 %v379
        %489 = vmatprep.subr.mxu0 0.0
        %490 = vmatpush1.msra.mxu0 %v378
        %491 = vmatprep.subr.mxu0 0.0
        %492 = vmatpush1.msra.mxu0 %v377
        %493 = vmatprep.subr.mxu0 0.0
        %494 = vmatpush2.msra.mxu0 0.0
        %495 = vmatprep.subr.mxu0 0.0
        %496 = vmatpush2.msra.mxu0 0.0
        %497 = vmatprep.subr.mxu0 0.0
        %498 = vmatpush2.msra.mxu0 0.0
        %499 = vmatprep.subr.mxu0 0.0
        %500 = vmatpush2.msra.mxu0 0.0
        %501 = vmatprep.subr.mxu0 0.0
        %502 = vmatpush2.msra.mxu0 0.0
        %503 = vmatprep.subr.mxu0 0.0
        %504 = vmatpush2.msra.mxu0 0.0
        %505 = vmatprep.subr.mxu0 0.0
        %506 = vmatpush2.msra.mxu0 0.0
        %507 = vmatprep.subr.mxu0 0.0
        %508 = vmatpush2.msra.mxu0 0.0
        %509 = vmatprep.subr.mxu0 0.0
        %510 = vmatpush2.msra.mxu0 0.0
        %511 = vmatprep.subr.mxu0 0.0
        %512 = vmatpush2.msra.mxu0 0.0
        %513 = vmatprep.subr.mxu0 0.0
        %514 = vmatpush2.msra.mxu0 0.0
        %515 = vmatprep.subr.mxu0 0.0
        %516 = vmatpush2.msra.mxu0 0.0
        %517 = vmatprep.subr.mxu0 0.0
        %518 = vmatpush2.msra.mxu0 0.0
        %519 = vmatprep.subr.mxu0 0.0
        %520 = vmatpush2.msra.mxu0 0.0
        %521 = vmatprep.subr.mxu0 0.0
        %522 = vmatpush2.msra.mxu0 0.0
        %523 = vmatprep.subr.mxu0 0.0
        %524 = vmatpush2.msra.mxu0 0.0
        %525 = vmatprep.mubr.f32.mxu0 0.0
        %526 = vmatmul.mubr.f32.gmra.mxu0 %v450
        %v527 = vpop.f32.mrf.mxu0
        %v528 = vadd.f32 0.0, %v527
        %v529 = vpop.f32.mrf.mxu0
        %530 = vmatprep.mubr.f32.mxu0 0.0
        %531 = vmatmul.mubr.f32.gmra.mxu0 %v453
        %v532 = vpop.f32.mrf.mxu0
        %v533 = vadd.f32 0.0, %v532
        %v534 = vpop.f32.mrf.mxu0
        %535 = vmatprep.mubr.f32.mxu0 0.0
        %536 = vmatmul.mubr.f32.gmra.mxu0 %v456
        %v537 = vpop.f32.mrf.mxu0
        %v538 = vadd.f32 0.0, %v537
        %v539 = vpop.f32.mrf.mxu0
        %540 = vmatprep.mubr.f32.mxu0 0.0
        %541 = vmatmul.mubr.f32.gmra.mxu0 %v459
        %v542 = vpop.f32.mrf.mxu0
        %v543 = vadd.f32 0.0, %v542
        %v544 = vpop.f32.mrf.mxu0
        %545 = vdwg.mxu0
        %v546 = vstv %s421
        %v547 = vmul.f32 %v528, %v546
        %v548 = vmul.f32 %v533, %v546
        %v549 = vmul.f32 %v538, %v546
        %v550 = vmul.f32 %v543, %v546
        %552 = vset.pattern.permute.xlu0 1
        %553 = vperm.xlu0 %552, %v444
        %v554 = vpop.permute.xlu0 %553
        %557 = vset.pattern.permute.xlu0 1
        %558 = vperm.xlu0 %557, %v445
        %v559 = vpop.permute.xlu0 %558
        %562 = vset.pattern.permute.xlu0 1
        %563 = vperm.xlu0 %562, %v446
        %v564 = vpop.permute.xlu0 %563
        %567 = vset.pattern.permute.xlu0 1
        %568 = vperm.xlu0 %567, %v447
        %v569 = vpop.permute.xlu0 %568
        %v571 = vadd.f32 %v547, %v554
        %v572 = vadd.f32 %v548, %v559
        %v573 = vadd.f32 %v549, %v564
        %v574 = vadd.f32 %v550, %v569
        %575 = vst [vmem:[%s165] sm:$0xff] %v571
        %576 = vst [vmem:[%s165 + $0x8] sm:$0xff] %v572
        %577 = vst [vmem:[%s165 + $0x10] sm:$0xff] %v573
        %578 = vst [vmem:[%s165 + $0x18] sm:$0xff] %v574
        %s579 = sadd.s32 32, %s375
        %s580 = scalar_lea.vmem [#allocation2], %s579
        %v581 = vld [vmem:[%s580] sm:$0xff]
        %v582 = vld [vmem:[%s580 + $0x8] sm:$0xff]
        %v583 = vld [vmem:[%s580 + $0x10] sm:$0xff]
        %v584 = vld [vmem:[%s580 + $0x18] sm:$0xff]
        %v585 = vsel %vm371, %v581, 0.0
        %v586 = vsel %vm372, %v582, 0.0
        %v587 = vsel %vm373, %v583, 0.0
        %v588 = vsel %vm374, %v584, 0.0
        %v589 = vadd.f32 %v585, %v586
        %v590 = vadd.f32 %v589, %v587
        %v591 = vadd.f32 %v590, %v588
        %592 = vadd.xlane.f32.xlu0 %v591
        %v593 = vpop.xlane.xlu0 %592
        %v594 = vrot.slane %v593, 4
        %v595 = vadd.f32 %v593, %v594
        %v596 = vrot.slane %v595, 2
        %v597 = vadd.f32 %v595, %v596
        %v598 = vrot.slane %v597, 1
        %v599 = vadd.f32 %v597, %v598
        %s600 = vtos %v599
        %v601 = vmul.f32 %v585, %v585
        %v602 = vmul.f32 %v586, %v586
        %v603 = vmul.f32 %v587, %v587
        %v604 = vmul.f32 %v588, %v588
        %v605 = vadd.f32 %v601, %v602
        %v606 = vadd.f32 %v605, %v603
        %v607 = vadd.f32 %v606, %v604
        %608 = vadd.xlane.f32.xlu0 %v607
        %v609 = vpop.xlane.xlu0 %608
        %v610 = vrot.slane %v609, 4
        %v611 = vadd.f32 %v609, %v610
        %v612 = vrot.slane %v611, 2
        %v613 = vadd.f32 %v611, %v612
        %v614 = vrot.slane %v613, 1
        %v615 = vadd.f32 %v613, %v614
        %s616 = vtos %v615
        %s617 = smul.f32 %s600, %s346
        %s618 = smul.f32 %s616, %s346
        %s619 = smul.f32 %s617, %s617
        %s620 = ssub.f32 %s618, %s619
        %s621 = smax.f32 %s620, 0.0
        %s622 = sadd.f32 %s621, 1e-05
        %v623 = vstv %s622
        %v624 = vrsqrt.pop %v623
        %s625 = vtos %v624
        %s626 = smul.f32 %s625, %s617
        %v627 = vstv %s626
        %v628 = vmul.f32 %v627, %v351
        %v629 = vmul.f32 %v627, %v352
        %v630 = vmul.f32 %v627, %v353
        %v631 = vmul.f32 %v627, %v354
        %636 = vrot.lane.b32.xlu0 %v628, 1
        %v637 = vpop.permute.xlu0 %636
        %638 = vrot.lane.b32.xlu0 %v629, 1
        %v639 = vpop.permute.xlu0 %638
        %640 = vrot.lane.b32.xlu0 %v630, 1
        %v641 = vpop.permute.xlu0 %640
        %642 = vrot.lane.b32.xlu0 %v631, 1
        %v643 = vpop.permute.xlu0 %642
        %v648 = vsub.f32 %v351, %v637
        %v649 = vsub.f32 %v352, %v639
        %v650 = vsub.f32 %v353, %v641
        %v651 = vsub.f32 %v354, %v643
        %652 = vmatprep.subr.mxu0 0.0
        %653 = vmatpush1.msra.mxu0 0.0
        %654 = vmatprep.subr.mxu0 0.0
        %655 = vmatpush1.msra.mxu0 0.0
        %656 = vmatprep.subr.mxu0 0.0
        %657 = vmatpush1.msra.mxu0 0.0
        %658 = vmatprep.subr.mxu0 0.0
        %659 = vmatpush1.msra.mxu0 0.0
        %660 = vmatprep.subr.mxu0 0.0
        %661 = vmatpush1.msra.mxu0 0.0
        %662 = vmatprep.subr.mxu0 0.0
        %663 = vmatpush1.msra.mxu0 0.0
        %664 = vmatprep.subr.mxu0 0.0
        %665 = vmatpush1.msra.mxu0 0.0
        %666 = vmatprep.subr.mxu0 0.0
        %667 = vmatpush1.msra.mxu0 0.0
        %668 = vmatprep.subr.mxu0 0.0
        %669 = vmatpush1.msra.mxu0 0.0
        %670 = vmatprep.subr.mxu0 0.0
        %671 = vmatpush1.msra.mxu0 0.0
        %672 = vmatprep.subr.mxu0 0.0
        %673 = vmatpush1.msra.mxu0 0.0
        %674 = vmatprep.subr.mxu0 0.0
        %675 = vmatpush1.msra.mxu0 0.0
        %676 = vmatprep.subr.mxu0 0.0
        %677 = vmatpush1.msra.mxu0 %v584
        %678 = vmatprep.subr.mxu0 0.0
        %679 = vmatpush1.msra.mxu0 %v583
        %680 = vmatprep.subr.mxu0 0.0
        %681 = vmatpush1.msra.mxu0 %v582
        %682 = vmatprep.subr.mxu0 0.0
        %683 = vmatpush1.msra.mxu0 %v581
        %684 = vmatprep.subr.mxu0 0.0
        %685 = vmatpush2.msra.mxu0 0.0
        %686 = vmatprep.subr.mxu0 0.0
        %687 = vmatpush2.msra.mxu0 0.0
        %688 = vmatprep.subr.mxu0 0.0
        %689 = vmatpush2.msra.mxu0 0.0
        %690 = vmatprep.subr.mxu0 0.0
        %691 = vmatpush2.msra.mxu0 0.0
        %692 = vmatprep.subr.mxu0 0.0
        %693 = vmatpush2.msra.mxu0 0.0
        %694 = vmatprep.subr.mxu0 0.0
        %695 = vmatpush2.msra.mxu0 0.0
        %696 = vmatprep.subr.mxu0 0.0
        %697 = vmatpush2.msra.mxu0 0.0
        %698 = vmatprep.subr.mxu0 0.0
        %699 = vmatpush2.msra.mxu0 0.0
        %700 = vmatprep.subr.mxu0 0.0
        %701 = vmatpush2.msra.mxu0 0.0
        %702 = vmatprep.subr.mxu0 0.0
        %703 = vmatpush2.msra.mxu0 0.0
        %704 = vmatprep.subr.mxu0 0.0
        %705 = vmatpush2.msra.mxu0 0.0
        %706 = vmatprep.subr.mxu0 0.0
        %707 = vmatpush2.msra.mxu0 0.0
        %708 = vmatprep.subr.mxu0 0.0
        %709 = vmatpush2.msra.mxu0 0.0
        %710 = vmatprep.subr.mxu0 0.0
        %711 = vmatpush2.msra.mxu0 0.0
        %712 = vmatprep.subr.mxu0 0.0
        %713 = vmatpush2.msra.mxu0 0.0
        %714 = vmatprep.subr.mxu0 0.0
        %715 = vmatpush2.msra.mxu0 0.0
        %716 = vmatprep.mubr.f32.mxu0 0.0
        %717 = vmatmul.mubr.f32.gmra.mxu0 %v450
        %v718 = vpop.f32.mrf.mxu0
        %v719 = vadd.f32 0.0, %v718
        %v720 = vpop.f32.mrf.mxu0
        %721 = vmatprep.mubr.f32.mxu0 0.0
        %722 = vmatmul.mubr.f32.gmra.mxu0 %v453
        %v723 = vpop.f32.mrf.mxu0
        %v724 = vadd.f32 0.0, %v723
        %v725 = vpop.f32.mrf.mxu0
        %726 = vmatprep.mubr.f32.mxu0 0.0
        %727 = vmatmul.mubr.f32.gmra.mxu0 %v456
        %v728 = vpop.f32.mrf.mxu0
        %v729 = vadd.f32 0.0, %v728
        %v730 = vpop.f32.mrf.mxu0
        %731 = vmatprep.mubr.f32.mxu0 0.0
        %732 = vmatmul.mubr.f32.gmra.mxu0 %v459
        %v733 = vpop.f32.mrf.mxu0
        %v734 = vadd.f32 0.0, %v733
        %v735 = vpop.f32.mrf.mxu0
        %736 = vdwg.mxu0
        %v737 = vstv %s625
        %v738 = vmul.f32 %v719, %v737
        %v739 = vmul.f32 %v724, %v737
        %v740 = vmul.f32 %v729, %v737
        %v741 = vmul.f32 %v734, %v737
        %743 = vset.pattern.permute.xlu0 1
        %744 = vperm.xlu0 %743, %v648
        %v745 = vpop.permute.xlu0 %744
        %748 = vset.pattern.permute.xlu0 1
        %749 = vperm.xlu0 %748, %v649
        %v750 = vpop.permute.xlu0 %749
        %753 = vset.pattern.permute.xlu0 1
        %754 = vperm.xlu0 %753, %v650
        %v755 = vpop.permute.xlu0 %754
        %758 = vset.pattern.permute.xlu0 1
        %759 = vperm.xlu0 %758, %v651
        %v760 = vpop.permute.xlu0 %759
        %v762 = vadd.f32 %v738, %v745
        %v763 = vadd.f32 %v739, %v750
        %v764 = vadd.f32 %v740, %v755
        %v765 = vadd.f32 %v741, %v760
        %s766 = scalar_lea.vmem %s165, 32 [#allocation8]
        %767 = vst [vmem:[%s766] sm:$0xff] %v762
        %768 = vst [vmem:[%s766 + $0x8] sm:$0xff] %v763
        %769 = vst [vmem:[%s766 + $0x10] sm:$0xff] %v764
        %770 = vst [vmem:[%s766 + $0x18] sm:$0xff] %v765
        %s771 = sand.u32 %s91, 1
        %s772 = sand.u32 %s91, 1
        %s773 = smul.addr %s772, 64
        %s774 = scalar_lea.vmem [#allocation8], %s773
        // Predicated region
        $region105: #{_lambda_.1} parent=27 // pred_check
          %p775 = pneg %p101
        $region106: #{_lambda_.1} parent=27 // pred_check_branch
          %777 = sbr.rel (%p775) target = $region108
        $region107: #{_lambda_.1} parent=27 // pred_region
          %s778 = smul.addr %s31, 8
          %s779 = scalar_lea.vmem %s6, %s778
          // Predicated region
          $region109: #{_lambda_.1} parent=107 // pred_check
            _
          $region110: #{_lambda_.1} parent=107 // pred_check_branch
            %781 = sbr.rel (0) target = $region112
          $region111: #{_lambda_.1} parent=107 // pred_region
            // Predicated region
            $region113: #{_lambda_.1} parent=111 // pred_check
              _
            $region114: #{_lambda_.1} parent=111 // pred_check_branch
              %783 = sbr.rel (0) target = $region116
            $region115: #{_lambda_.1} parent=111 // pred_region
              // Predicated region
              $region128: #{_lambda_.1} parent=115 // pred_check
                _
              $region129: #{_lambda_.1} parent=115 // pred_check_branch
                %813 = sbr.rel (0) target = $region131
              $region130: #{_lambda_.1} parent=115 // pred_region
                loop: start=0, step=1, limit=1
                $region132: #{_lambda_.1} parent=130 // loop_pre_header
                  _
                $region133: #{_lambda_.1} parent=130 // loop_header
                  %s815 = sphi 0, %s819
                  %p816 = scmp.ge.s32.totalorder %s815, 1
                  %s820 = sphi %s774, %s774
                  %s821 = sphi %s779, %s779
                $region134: #{_lambda_.1} parent=130 // loop_header_branch
                  %818 = sbr.rel (%p816) target = $region138
                $region135: #{_lambda_.1} parent=130 // loop_body
                  %v822 = vld [vmem:[%s820] sm:$0xff]
                  %823 = vst [vmem:[%s821] sm:$0xff] %v822
                  %v824 = vld [vmem:[%s820 + $0x8] sm:$0xff]
                  %825 = vst [vmem:[%s821 + $0x18] sm:$0xff] %v824
                  %v826 = vld [vmem:[%s820 + $0x10] sm:$0xff]
                  %827 = vst [vmem:[%s821 + $0x30] sm:$0xff] %v826
                  %v828 = vld [vmem:[%s820 + $0x18] sm:$0xff]
                  %829 = vst [vmem:[%s821 + $0x48] sm:$0xff] %v828
                  %v830 = vld [vmem:[%s820 + $0x20] sm:$0xff]
                  %831 = vst [vmem:[%s821 + $0x60] sm:$0xff] %v830
                  %v832 = vld [vmem:[%s820 + $0x28] sm:$0xff]
                  %833 = vst [vmem:[%s821 + $0x78] sm:$0xff] %v832
                  %v834 = vld [vmem:[%s820 + $0x30] sm:$0xff]
                  %835 = vst [vmem:[%s821 + $0x90] sm:$0xff] %v834
                  %v836 = vld [vmem:[%s820 + $0x38] sm:$0xff]
                  %837 = vst [vmem:[%s821 + $0xa8] sm:$0xff] %v836
                $region136: #{_lambda_.1} parent=130 // loop_footer
                  %s819 = sadd.s32 1, %s815
                $region137: #{_lambda_.1} parent=130 // loop_footer_branch
                  %814 = sbr.rel target = $region133
                $region138: #{_lambda_.1} parent=130 // loop_exit
                  _
              $region131: #{_lambda_.1} parent=115 // pred_fallthru
                _
              // Predicated region
              $region139: #{_lambda_.1} parent=115 // pred_check
                _
              $region140: #{_lambda_.1} parent=115 // pred_check_branch
                %839 = sbr.rel target = $region142
              $region141: #{_lambda_.1} parent=115 // pred_region
                _
              $region142: #{_lambda_.1} parent=115 // pred_fallthru
                _
            $region116: #{_lambda_.1} parent=111 // pred_fallthru
              _
            // Predicated region
            $region117: #{_lambda_.1} parent=111 // pred_check
              _
            $region118: #{_lambda_.1} parent=111 // pred_check_branch
              %785 = sbr.rel target = $region120
            $region119: #{_lambda_.1} parent=111 // pred_region
              %s787 = ssub.s32 256, 1
              loop: start=0, step=1, limit=1
              $region121: #{_lambda_.1} parent=119 // loop_pre_header
                _
              $region122: #{_lambda_.1} parent=119 // loop_header
                %s789 = sphi 0, %s793
                %p790 = scmp.ge.s32.totalorder %s789, 1
                %s794 = sphi %s774, %s774
                %s795 = sphi %s779, %s779
              $region123: #{_lambda_.1} parent=119 // loop_header_branch
                %792 = sbr.rel (%p790) target = $region127
              $region124: #{_lambda_.1} parent=119 // loop_body
                %v796 = vld [vmem:[%s794] sm:%s787]
                %797 = vst [vmem:[%s795] sm:%s787] %v796
                %v798 = vld [vmem:[%s794 + $0x8] sm:%s787]
                %799 = vst [vmem:[%s795 + $0x18] sm:%s787] %v798
                %v800 = vld [vmem:[%s794 + $0x10] sm:%s787]
                %801 = vst [vmem:[%s795 + $0x30] sm:%s787] %v800
                %v802 = vld [vmem:[%s794 + $0x18] sm:%s787]
                %803 = vst [vmem:[%s795 + $0x48] sm:%s787] %v802
                %v804 = vld [vmem:[%s794 + $0x20] sm:%s787]
                %805 = vst [vmem:[%s795 + $0x60] sm:%s787] %v804
                %v806 = vld [vmem:[%s794 + $0x28] sm:%s787]
                %807 = vst [vmem:[%s795 + $0x78] sm:%s787] %v806
                %v808 = vld [vmem:[%s794 + $0x30] sm:%s787]
                %809 = vst [vmem:[%s795 + $0x90] sm:%s787] %v808
                %v810 = vld [vmem:[%s794 + $0x38] sm:%s787]
                %811 = vst [vmem:[%s795 + $0xa8] sm:%s787] %v810
              $region125: #{_lambda_.1} parent=119 // loop_footer
                %s793 = sadd.s32 1, %s789
              $region126: #{_lambda_.1} parent=119 // loop_footer_branch
                %788 = sbr.rel target = $region122
              $region127: #{_lambda_.1} parent=119 // loop_exit
                _
            $region120: #{_lambda_.1} parent=111 // pred_fallthru
              _
          $region112: #{_lambda_.1} parent=107 // pred_fallthru
            _
          %840 = vnop
        $region108: #{_lambda_.1} parent=27 // pred_fallthru
          _
      $region28: #{_lambda_.1} parent=5 // pred_fallthru
        _
      %p841 = scmp.le.s32.totalorder 2, %s26
      // Predicated region
      $region143: #{_lambda_.1} parent=5 // pred_check
        %p842 = pneg %p841
      $region144: #{_lambda_.1} parent=5 // pred_check_branch
        %844 = sbr.rel (%p842) target = $region146
      $region145: #{_lambda_.1} parent=5 // pred_region
        %s845 = ssub.s32 %s26, 2
        // Predicated region
        $region147: #{_lambda_.1} parent=145 // pred_check
          %p846 = pneg %p107
        $region148: #{_lambda_.1} parent=145 // pred_check_branch
          %848 = sbr.rel (%p846) target = $region150
        $region149: #{_lambda_.1} parent=145 // pred_region
          %s849 = sand.u32 %s92, 1
          %s850 = sand.u32 %s92, 1
          %s851 = smul.addr %s850, 64
          %s852 = scalar_lea.vmem [#allocation8], %s851
        $region150: #{_lambda_.1} parent=145 // pred_fallthru
          _
      $region146: #{_lambda_.1} parent=5 // pred_fallthru
        _
    $region6: #{_lambda_.1} parent=1 // loop_footer
      %s30 = sadd.s32 1, %s26
    $region7: #{_lambda_.1} parent=1 // loop_footer_branch
      %25 = sbr.rel target = $region3
    $region8: #{_lambda_.1} parent=1 // loop_exit
      _
  %853 = vsyncmov [#allocation3]
  %s854 = vpop.sfrf %853
  %p855 = scmp.eq.s32.totalorder %s854, 0
  %p856 = pneg %p855
  %858 = shalt.err (%p856)
  %s859 = scalar_lea.sflag [#allocation3], 1
  %860 = vsyncmov %s859
  %s861 = vpop.sfrf %860
  %p862 = scmp.eq.s32.totalorder %s861, 0
  %p863 = pneg %p862
  %865 = shalt.err (%p863)

</llo_original>
